<compile_context>
chip_gen: v7x
topology: tpu7x:2x2x1
jax: 0.10.0
libtpu: 0.0.40
codegen_flags: <defaults>
</compile_context>

<pallas_src>
import functools

import jax
import jax.numpy as jnp
from jax import lax
from jax.experimental import pallas as pl
from jax.experimental.pallas import tpu as pltpu


def _round_up(x, m):
    return ((x + m - 1) // m) * m


# ----------------------------------------------------------------------------
# Fused forward kernel: one modality per grid step (encoder + decoder + loss).
# ----------------------------------------------------------------------------
def _scmodel_kernel(xc_ref, xn_ref, w1_ref, rhoT_ref, w2_ref, wmuls_ref,
                    walphaT_ref, bias_ref, eps_ref, loss_ref,
                    *, n_gene, n_peak, n_topic):
    i = pl.program_id(0)                      # 0 = RNA modality, 1 = ATAC modality
    B = xc_ref.shape[0]
    H = w1_ref.shape[1]                       # 2*emb_size
    E = w2_ref.shape[1]                       # emb_size
    K = n_topic

    # Merged bias buffer: [b1 (H) | b2 (E) | b_mu,b_logsigma (2K)]  (static slices: free)
    bias = bias_ref[...]
    b1 = bias[:, :H]
    b2 = bias[:, H:H + E]
    bmuls = bias[:, H + E:]

    # ---- VAE encoder: 2-layer ReLU MLP + packed mu|log_sigma head ----
    # Padded feature lanes of x_norm are zero, so the zero-padded w1 rows are inert.
    h1 = jnp.maximum(
        jnp.dot(xn_ref[...], w1_ref[...], preferred_element_type=jnp.float32) + b1, 0.0)
    h2 = jnp.maximum(
        jnp.dot(h1, w2_ref[...], preferred_element_type=jnp.float32) + b2, 0.0)
    muls = jnp.dot(h2, wmuls_ref[...], preferred_element_type=jnp.float32) + bmuls  # (B,2K)
    mu, ls = muls[:, :K], muls[:, K:]
    kl = -0.5 * jnp.sum(1.0 + ls - mu * mu - jnp.exp(ls), axis=-1, keepdims=True)    # (B,1)

    # ---- reparameterize + theta = softmax(z) ----
    z = mu + eps_ref[...] * jnp.exp(0.5 * ls)
    z = z - jnp.max(z, axis=-1, keepdims=True)
    ez = jnp.exp(z)
    theta = ez / jnp.sum(ez, axis=-1, keepdims=True)                                 # (B,K)

    # ---- LDEC decoder: beta built directly in (K, Mp) layout ----
    # softmax over the (padded) feature axis; padded lanes masked out of the softmax.
    n_valid = jnp.where(i == 0, jnp.int32(n_gene), jnp.int32(n_peak))
    logits = jnp.dot(walphaT_ref[...], rhoT_ref[...],
                     preferred_element_type=jnp.float32)                             # (K,Mp)
    lane = lax.broadcasted_iota(jnp.int32, logits.shape, 1)
    logits = jnp.where(lane < n_valid, logits, jnp.float32(-1e30))
    logits = logits - jnp.max(logits, axis=-1, keepdims=True)
    el = jnp.exp(logits)
    beta = el / jnp.sum(el, axis=-1, keepdims=True)                                  # exact recip

    res = jnp.dot(theta, beta, preferred_element_type=jnp.float32)                   # (B,Mp)
    # Padded lanes: beta ~ 0 and x_count == 0, so they contribute nothing.
    recon = -jnp.sum(jnp.log(res + 1e-6) * xc_ref[...], axis=-1, keepdims=True)      # (B,1)

    inv_b = jnp.float32(1.0 / B)
    recon_mean = jnp.sum(recon, axis=0, keepdims=True) * inv_b                       # (1,1)
    kl_mean = jnp.sum(kl, axis=0, keepdims=True) * inv_b                             # (1,1)

    # Lane-dense, unmasked (8,128) store: [0,0] = mean(recon_m), [0,1] = mean(kl_m).
    row = lax.broadcasted_iota(jnp.int32, loss_ref.shape, 0)
    lane_o = lax.broadcasted_iota(jnp.int32, loss_ref.shape, 1)
    loss_ref[...] = (jnp.where((row == 0) & (lane_o == 0), recon_mean, 0.0)
                     + jnp.where((row == 0) & (lane_o == 1), kl_mean, 0.0))


# ----------------------------------------------------------------------------
# Wrapper: one pallas_call; modality axis (size 2) marked "parallel".
# ----------------------------------------------------------------------------
def _stack_pad_features(a_rna, a_atac, m_pad):
    """(B,G) & (B,P) zero-padded to (B,Mp) and stacked -> (2,B,Mp)."""
    def pad(a):
        return jnp.pad(a, ((0, 0), (0, m_pad - a.shape[1])))
    return jnp.stack([pad(a_rna), pad(a_atac)], axis=0)


def sc_model_forward(params, batch, eps):
    RNA, RNA_norm, ATAC, ATAC_norm = batch[0], batch[1], batch[2], batch[3]
    G, P = RNA.shape[1], ATAC.shape[1]
    K = params["walphaT"].shape[1]
    m_pad = params["rhoT_pad"].shape[-1]

    x_count = _stack_pad_features(RNA, ATAC, m_pad)
    x_norm = _stack_pad_features(RNA_norm, ATAC_norm, m_pad)

    args = (x_count, x_norm, params["w1_pad"], params["rhoT_pad"],
            params["w2"], params["wmuls"], params["walphaT"],
            params["bias"], eps)

    def modality_spec(a):
        # Pick modality block i; leading modality dim squeezed out of the kernel ref.
        rest = a.shape[1:]
        n = len(rest)
        return pl.BlockSpec((None,) + rest, lambda i, n=n: (i,) + (0,) * n)

    kernel = functools.partial(_scmodel_kernel, n_gene=G, n_peak=P, n_topic=K)

    losses = pl.pallas_call(
        kernel,
        grid=(2,),
        in_specs=[modality_spec(a) for a in args],
        out_specs=pl.BlockSpec((8, 128), lambda i: (i, 0)),
        out_shape=jax.ShapeDtypeStruct((16, 128), jnp.float32),
        compiler_params=pltpu.CompilerParams(
            dimension_semantics=("parallel",)),        # modality split -> 2 TCs on v7x
    )(*args)

    losses = losses.reshape(2, 8, 128)
    recon_loss = losses[0, 0, 0] + losses[1, 0, 0]   # mean(recon1) + mean(recon2)
    kl_loss = losses[0, 0, 1] + losses[1, 0, 1]      # mean(kl1) + mean(kl2)
    edge_recon_loss = jnp.float32(0.0)
    # use_gnn == False branch: emb = cat(rho, eta) (decoder feature embeddings).
    emb = jnp.concatenate([params["rho_rna"], params["rho_atac"]], axis=0)
    return recon_loss, kl_loss, edge_recon_loss, emb


# ----------------------------------------------------------------------------
# Parameter construction (deterministic, synthetic), in the packed / stacked /
# padded layout the fused kernel consumes.
# ----------------------------------------------------------------------------
def init_params(key, n_gene, n_peak, emb_size, n_topic):
    H = 2 * emb_size
    m_pad = _round_up(max(n_gene, n_peak), 128)
    ks = jax.random.split(key, 20)

    def u(k, shape, fan_in):
        bnd = float(fan_in) ** -0.5
        return jax.random.uniform(k, shape, jnp.float32, -bnd, bnd)

    def enc(keys, n_feat):
        w1 = u(keys[0], (n_feat, H), n_feat)
        b1 = u(keys[1], (1, H), n_feat)
        w2 = u(keys[2], (H, emb_size), H)
        b2 = u(keys[3], (1, emb_size), H)
        wmu = u(keys[4], (emb_size, n_topic), emb_size)
        bmu = u(keys[5], (1, n_topic), emb_size)
        wls = u(keys[6], (emb_size, n_topic), emb_size)
        bls = u(keys[7], (1, n_topic), emb_size)
        wmuls = jnp.concatenate([wmu, wls], axis=1)                 # packed mu|log_sigma head
        bias = jnp.concatenate([b1, b2, bmu, bls], axis=1)          # merged bias buffer
        w1_pad = jnp.pad(w1, ((0, m_pad - n_feat), (0, 0)))         # zero-padded features
        return w1_pad, w2, wmuls, bias

    w1r, w2r, wmlr, biasr = enc(ks[0:8], n_gene)
    w1a, w2a, wmla, biasa = enc(ks[8:16], n_peak)

    rho_rna = jax.random.normal(ks[16], (n_gene, emb_size), jnp.float32)
    rho_atac = jax.random.normal(ks[17], (n_peak, emb_size), jnp.float32)
    walphaT_rna = u(ks[18], (n_topic, emb_size), emb_size)           # W_alpha^T
    walphaT_atac = u(ks[19], (n_topic, emb_size), emb_size)

    def padT(rho):                                                   # (M,E) -> (E,Mp)
        rt = rho.T
        return jnp.pad(rt, ((0, 0), (0, m_pad - rt.shape[1])))

    stack = lambda a, b: jnp.stack([a, b], axis=0)
    return dict(
        w1_pad=stack(w1r, w1a),                  # (2, Mp, 2E)
        w2=stack(w2r, w2a),                      # (2, 2E, E)
        wmuls=stack(wmlr, wmla),                 # (2, E, 2K)
        walphaT=stack(walphaT_rna, walphaT_atac),  # (2, K, E)
        bias=stack(biasr, biasa),                # (2, 1, 2E+E+2K)
        rhoT_pad=stack(padT(rho_rna), padT(rho_atac)),  # (2, E, Mp) — transposed once at init
        rho_rna=rho_rna, rho_atac=rho_atac,      # kept only for emb = cat(rho, eta)
    )


if __name__ == "__main__":
    # Small shapes consistent with the module:
    B = 8        # batch of cells
    G = 32       # num_of_gene
    P = 48       # num_of_peak
    E = 16       # emb_size
    K = 8        # num_of_topic

    root = jax.random.PRNGKey(0)
    kp, kd, keps = jax.random.split(root, 3)
    params = init_params(kp, G, P, E, K)

    kx1, kx2 = jax.random.split(kd)
    # synthetic count-like data and row-normalized versions
    RNA = jnp.floor(10.0 * jax.random.uniform(kx1, (B, G), jnp.float32))
    ATAC = jnp.floor(4.0 * jax.random.uniform(kx2, (B, P), jnp.float32))
    RNA_norm = RNA / (jnp.sum(RNA, axis=-1, keepdims=True) + 1e-6)
    ATAC_norm = ATAC / (jnp.sum(ATAC, axis=-1, keepdims=True) + 1e-6)
    batch = (RNA, RNA_norm, ATAC, ATAC_norm, None, None, None, None, None)

    # Reparameterization noise (exact N(0,1), equivalent to torch.randn_like).
    eps = jax.random.normal(keps, (2, B, K), jnp.float32)

    recon_loss, kl_loss, edge_recon_loss, emb = sc_model_forward(params, batch, eps)
    jax.block_until_ready((recon_loss, kl_loss, edge_recon_loss, emb))

    assert emb.shape == (G + P, E)
    assert recon_loss.shape == () and kl_loss.shape == ()
    assert bool(jnp.isfinite(recon_loss)) and bool(jnp.isfinite(kl_loss))
    print("KERNEL_OK")
</pallas_src>

<mosaic_0001>
module attributes {stable_mosaic.version = 11 : i64} {
  func.func @_scmodel_kernel(%arg0: i32, %arg1: memref<1x8x128xf32, #tpu.memory_space<vmem>>, %arg2: memref<1x8x128xf32, #tpu.memory_space<vmem>>, %arg3: memref<1x128x32xf32, #tpu.memory_space<vmem>>, %arg4: memref<1x16x128xf32, #tpu.memory_space<vmem>>, %arg5: memref<1x32x16xf32, #tpu.memory_space<vmem>>, %arg6: memref<1x16x16xf32, #tpu.memory_space<vmem>>, %arg7: memref<1x8x16xf32, #tpu.memory_space<vmem>>, %arg8: memref<1x1x64xf32, #tpu.memory_space<vmem>>, %arg9: memref<1x8x8xf32, #tpu.memory_space<vmem>>, %arg10: memref<8x128xf32, #tpu.memory_space<vmem>>) attributes {dimension_semantics = [#tpu.dimension_semantics<parallel>], iteration_bounds = array<i64: 2>, scalar_prefetch = 0 : i64, scratch_operands = 0 : i64, tpu.core_type = #tpu.core_type<tc>, window_params = [{transform_indices = @transform_0, window_bounds = array<i64: 1, 8, 128>}, {transform_indices = @transform_1, window_bounds = array<i64: 1, 8, 128>}, {transform_indices = @transform_2, window_bounds = array<i64: 1, 128, 32>}, {transform_indices = @transform_3, window_bounds = array<i64: 1, 16, 128>}, {transform_indices = @transform_4, window_bounds = array<i64: 1, 32, 16>}, {transform_indices = @transform_5, window_bounds = array<i64: 1, 16, 16>}, {transform_indices = @transform_6, window_bounds = array<i64: 1, 8, 16>}, {transform_indices = @transform_7, window_bounds = array<i64: 1, 1, 64>}, {transform_indices = @transform_8, window_bounds = array<i64: 1, 8, 8>}, {transform_indices = @transform_9, window_bounds = array<i64: 8, 128>}]} {
    %c0 = arith.constant 0 : index
    %c0_0 = arith.constant 0 : index
    %c0_1 = arith.constant 0 : index
    %0 = vector.load %arg8[%c0, %c0_0, %c0_1] : memref<1x1x64xf32, #tpu.memory_space<vmem>>, vector<1x1x64xf32>
    %1 = vector.shape_cast %0 : vector<1x1x64xf32> to vector<1x64xf32>
    %2 = vector.extract_strided_slice %1 {offsets = [0, 0], sizes = [1, 32], strides = [1, 1]} : vector<1x64xf32> to vector<1x32xf32>
    %3 = vector.extract_strided_slice %1 {offsets = [0, 32], sizes = [1, 16], strides = [1, 1]} : vector<1x64xf32> to vector<1x16xf32>
    %4 = vector.extract_strided_slice %1 {offsets = [0, 48], sizes = [1, 16], strides = [1, 1]} : vector<1x64xf32> to vector<1x16xf32>
    %c0_2 = arith.constant 0 : index
    %c0_3 = arith.constant 0 : index
    %c0_4 = arith.constant 0 : index
    %5 = vector.load %arg2[%c0_2, %c0_3, %c0_4] : memref<1x8x128xf32, #tpu.memory_space<vmem>>, vector<1x8x128xf32>
    %6 = vector.shape_cast %5 : vector<1x8x128xf32> to vector<8x128xf32>
    %c0_5 = arith.constant 0 : index
    %c0_6 = arith.constant 0 : index
    %c0_7 = arith.constant 0 : index
    %7 = vector.load %arg3[%c0_5, %c0_6, %c0_7] : memref<1x128x32xf32, #tpu.memory_space<vmem>>, vector<1x128x32xf32>
    %8 = vector.shape_cast %7 : vector<1x128x32xf32> to vector<128x32xf32>
    %cst = arith.constant dense<0.000000e+00> : vector<8x32xf32>
    %9 = tpu.matmul %6, %8, %cst {dimension_numbers = #tpu.dot_dimension_numbers<[1], [0], [0], [1], [0, 0, 1, 1], [], []>} : vector<8x128xf32>, vector<128x32xf32>, vector<8x32xf32> -> vector<8x32xf32>
    %10 = vector.broadcast %2 : vector<1x32xf32> to vector<8x32xf32>
    %11 = arith.addf %9, %10 : vector<8x32xf32>
    %cst_8 = arith.constant 0.000000e+00 : f32
    %12 = vector.broadcast %cst_8 : f32 to vector<8x32xf32>
    %13 = arith.maximumf %11, %12 : vector<8x32xf32>
    %c0_9 = arith.constant 0 : index
    %c0_10 = arith.constant 0 : index
    %c0_11 = arith.constant 0 : index
    %14 = vector.load %arg5[%c0_9, %c0_10, %c0_11] : memref<1x32x16xf32, #tpu.memory_space<vmem>>, vector<1x32x16xf32>
    %15 = vector.shape_cast %14 : vector<1x32x16xf32> to vector<32x16xf32>
    %cst_12 = arith.constant dense<0.000000e+00> : vector<8x16xf32>
    %16 = tpu.matmul %13, %15, %cst_12 {dimension_numbers = #tpu.dot_dimension_numbers<[1], [0], [0], [1], [0, 0, 1, 1], [], []>} : vector<8x32xf32>, vector<32x16xf32>, vector<8x16xf32> -> vector<8x16xf32>
    %17 = vector.broadcast %3 : vector<1x16xf32> to vector<8x16xf32>
    %18 = arith.addf %16, %17 : vector<8x16xf32>
    %cst_13 = arith.constant 0.000000e+00 : f32
    %19 = vector.broadcast %cst_13 : f32 to vector<8x16xf32>
    %20 = arith.maximumf %18, %19 : vector<8x16xf32>
    %c0_14 = arith.constant 0 : index
    %c0_15 = arith.constant 0 : index
    %c0_16 = arith.constant 0 : index
    %21 = vector.load %arg6[%c0_14, %c0_15, %c0_16] : memref<1x16x16xf32, #tpu.memory_space<vmem>>, vector<1x16x16xf32>
    %22 = vector.shape_cast %21 : vector<1x16x16xf32> to vector<16x16xf32>
    %cst_17 = arith.constant dense<0.000000e+00> : vector<8x16xf32>
    %23 = tpu.matmul %20, %22, %cst_17 {dimension_numbers = #tpu.dot_dimension_numbers<[1], [0], [0], [1], [0, 0, 1, 1], [], []>} : vector<8x16xf32>, vector<16x16xf32>, vector<8x16xf32> -> vector<8x16xf32>
    %24 = vector.broadcast %4 : vector<1x16xf32> to vector<8x16xf32>
    %25 = arith.addf %23, %24 : vector<8x16xf32>
    %26 = vector.extract_strided_slice %25 {offsets = [0, 0], sizes = [8, 8], strides = [1, 1]} : vector<8x16xf32> to vector<8x8xf32>
    %27 = vector.extract_strided_slice %25 {offsets = [0, 8], sizes = [8, 8], strides = [1, 1]} : vector<8x16xf32> to vector<8x8xf32>
    %cst_18 = arith.constant 1.000000e+00 : f32
    %28 = vector.broadcast %cst_18 : f32 to vector<8x8xf32>
    %29 = arith.addf %28, %27 : vector<8x8xf32>
    %30 = arith.mulf %26, %26 : vector<8x8xf32>
    %31 = arith.subf %29, %30 : vector<8x8xf32>
    %32 = math.exp %27 : vector<8x8xf32>
    %33 = arith.subf %31, %32 : vector<8x8xf32>
    %cst_19 = arith.constant dense<0.000000e+00> : vector<8xf32>
    %34 = vector.multi_reduction <add>, %33, %cst_19 [1] : vector<8x8xf32> to vector<8xf32>
    %35 = vector.shape_cast %34 : vector<8xf32> to vector<8x1xf32>
    %cst_20 = arith.constant -5.000000e-01 : f32
    %36 = vector.broadcast %cst_20 : f32 to vector<8x1xf32>
    %37 = arith.mulf %36, %35 : vector<8x1xf32>
    %c0_21 = arith.constant 0 : index
    %c0_22 = arith.constant 0 : index
    %c0_23 = arith.constant 0 : index
    %38 = vector.load %arg9[%c0_21, %c0_22, %c0_23] : memref<1x8x8xf32, #tpu.memory_space<vmem>>, vector<1x8x8xf32>
    %39 = vector.shape_cast %38 : vector<1x8x8xf32> to vector<8x8xf32>
    %cst_24 = arith.constant 5.000000e-01 : f32
    %40 = vector.broadcast %cst_24 : f32 to vector<8x8xf32>
    %41 = arith.mulf %40, %27 : vector<8x8xf32>
    %42 = math.exp %41 : vector<8x8xf32>
    %43 = arith.mulf %39, %42 : vector<8x8xf32>
    %44 = arith.addf %26, %43 : vector<8x8xf32>
    %cst_25 = arith.constant dense<0xFF800000> : vector<8xf32>
    %45 = vector.multi_reduction <maximumf>, %44, %cst_25 [1] : vector<8x8xf32> to vector<8xf32>
    %46 = vector.shape_cast %45 : vector<8xf32> to vector<8x1xf32>
    %47 = vector.broadcast %46 : vector<8x1xf32> to vector<8x8xf32>
    %48 = arith.subf %44, %47 : vector<8x8xf32>
    %49 = math.exp %48 : vector<8x8xf32>
    %cst_26 = arith.constant dense<0.000000e+00> : vector<8xf32>
    %50 = vector.multi_reduction <add>, %49, %cst_26 [1] : vector<8x8xf32> to vector<8xf32>
    %51 = vector.shape_cast %50 : vector<8xf32> to vector<8x1xf32>
    %52 = vector.broadcast %51 : vector<8x1xf32> to vector<8x8xf32>
    %53 = arith.divf %49, %52 : vector<8x8xf32>
    %c0_i32 = arith.constant 0 : i32
    %54 = arith.cmpi eq, %arg0, %c0_i32 : i32
    %c32_i32 = arith.constant 32 : i32
    %c48_i32 = arith.constant 48 : i32
    %55 = arith.select %54, %c32_i32, %c48_i32 : i32
    %c0_27 = arith.constant 0 : index
    %c0_28 = arith.constant 0 : index
    %c0_29 = arith.constant 0 : index
    %56 = vector.load %arg7[%c0_27, %c0_28, %c0_29] : memref<1x8x16xf32, #tpu.memory_space<vmem>>, vector<1x8x16xf32>
    %57 = vector.shape_cast %56 : vector<1x8x16xf32> to vector<8x16xf32>
    %c0_30 = arith.constant 0 : index
    %c0_31 = arith.constant 0 : index
    %c0_32 = arith.constant 0 : index
    %58 = vector.load %arg4[%c0_30, %c0_31, %c0_32] : memref<1x16x128xf32, #tpu.memory_space<vmem>>, vector<1x16x128xf32>
    %59 = vector.shape_cast %58 : vector<1x16x128xf32> to vector<16x128xf32>
    %cst_33 = arith.constant dense<0.000000e+00> : vector<8x128xf32>
    %60 = tpu.matmul %57, %59, %cst_33 {dimension_numbers = #tpu.dot_dimension_numbers<[1], [0], [0], [1], [0, 0, 1, 1], [], []>} : vector<8x16xf32>, vector<16x128xf32>, vector<8x128xf32> -> vector<8x128xf32>
    %61 = tpu.iota {dimensions = array<i32: 1>} : vector<8x128xi32>
    %62 = vector.broadcast %55 : i32 to vector<8x128xi32>
    %63 = arith.cmpi slt, %61, %62 : vector<8x128xi32>
    %cst_34 = arith.constant -1.000000e+30 : f32
    %64 = vector.broadcast %cst_34 : f32 to vector<8x128xf32>
    %65 = arith.select %63, %60, %64 : vector<8x128xi1>, vector<8x128xf32>
    %cst_35 = arith.constant dense<0xFF800000> : vector<8xf32>
    %66 = vector.multi_reduction <maximumf>, %65, %cst_35 [1] : vector<8x128xf32> to vector<8xf32>
    %67 = vector.shape_cast %66 : vector<8xf32> to vector<8x1xf32>
    %68 = vector.broadcast %67 : vector<8x1xf32> to vector<8x128xf32>
    %69 = arith.subf %65, %68 : vector<8x128xf32>
    %70 = math.exp %69 : vector<8x128xf32>
    %cst_36 = arith.constant dense<0.000000e+00> : vector<8xf32>
    %71 = vector.multi_reduction <add>, %70, %cst_36 [1] : vector<8x128xf32> to vector<8xf32>
    %72 = vector.shape_cast %71 : vector<8xf32> to vector<8x1xf32>
    %73 = vector.broadcast %72 : vector<8x1xf32> to vector<8x128xf32>
    %74 = arith.divf %70, %73 : vector<8x128xf32>
    %cst_37 = arith.constant dense<0.000000e+00> : vector<8x128xf32>
    %75 = tpu.matmul %53, %74, %cst_37 {dimension_numbers = #tpu.dot_dimension_numbers<[1], [0], [0], [1], [0, 0, 1, 1], [], []>} : vector<8x8xf32>, vector<8x128xf32>, vector<8x128xf32> -> vector<8x128xf32>
    %cst_38 = arith.constant 9.99999997E-7 : f32
    %76 = vector.broadcast %cst_38 : f32 to vector<8x128xf32>
    %77 = arith.addf %75, %76 : vector<8x128xf32>
    %78 = math.log %77 : vector<8x128xf32>
    %c0_39 = arith.constant 0 : index
    %c0_40 = arith.constant 0 : index
    %c0_41 = arith.constant 0 : index
    %79 = vector.load %arg1[%c0_39, %c0_40, %c0_41] : memref<1x8x128xf32, #tpu.memory_space<vmem>>, vector<1x8x128xf32>
    %80 = vector.shape_cast %79 : vector<1x8x128xf32> to vector<8x128xf32>
    %81 = arith.mulf %78, %80 : vector<8x128xf32>
    %cst_42 = arith.constant dense<0.000000e+00> : vector<8xf32>
    %82 = vector.multi_reduction <add>, %81, %cst_42 [1] : vector<8x128xf32> to vector<8xf32>
    %83 = vector.shape_cast %82 : vector<8xf32> to vector<8x1xf32>
    %cst_43 = arith.constant 0.000000e+00 : f32
    %84 = vector.broadcast %cst_43 : f32 to vector<8x1xf32>
    %85 = arith.subf %84, %83 : vector<8x1xf32>
    %cst_44 = arith.constant dense<0.000000e+00> : vector<1xf32>
    %86 = vector.multi_reduction <add>, %85, %cst_44 [0] : vector<8x1xf32> to vector<1xf32>
    %87 = vector.shape_cast %86 : vector<1xf32> to vector<1x1xf32>
    %cst_45 = arith.constant 1.250000e-01 : f32
    %88 = vector.broadcast %cst_45 : f32 to vector<1x1xf32>
    %89 = arith.mulf %87, %88 : vector<1x1xf32>
    %cst_46 = arith.constant dense<0.000000e+00> : vector<1xf32>
    %90 = vector.multi_reduction <add>, %37, %cst_46 [0] : vector<8x1xf32> to vector<1xf32>
    %91 = vector.shape_cast %90 : vector<1xf32> to vector<1x1xf32>
    %cst_47 = arith.constant 1.250000e-01 : f32
    %92 = vector.broadcast %cst_47 : f32 to vector<1x1xf32>
    %93 = arith.mulf %91, %92 : vector<1x1xf32>
    %94 = tpu.iota {dimensions = array<i32: 0>} : vector<8x128xi32>
    %95 = tpu.iota {dimensions = array<i32: 1>} : vector<8x128xi32>
    %c0_i32_48 = arith.constant 0 : i32
    %96 = vector.broadcast %c0_i32_48 : i32 to vector<8x128xi32>
    %97 = arith.cmpi eq, %94, %96 : vector<8x128xi32>
    %c0_i32_49 = arith.constant 0 : i32
    %98 = vector.broadcast %c0_i32_49 : i32 to vector<8x128xi32>
    %99 = arith.cmpi eq, %95, %98 : vector<8x128xi32>
    %100 = arith.andi %97, %99 : vector<8x128xi1>
    %cst_50 = arith.constant 0.000000e+00 : f32
    %101 = vector.shape_cast %89 : vector<1x1xf32> to vector<1x1xf32>
    %102 = vector.broadcast %101 : vector<1x1xf32> to vector<8x128xf32>
    %103 = vector.broadcast %cst_50 : f32 to vector<8x128xf32>
    %104 = arith.select %100, %102, %103 : vector<8x128xi1>, vector<8x128xf32>
    %c0_i32_51 = arith.constant 0 : i32
    %105 = vector.broadcast %c0_i32_51 : i32 to vector<8x128xi32>
    %106 = arith.cmpi eq, %94, %105 : vector<8x128xi32>
    %c1_i32 = arith.constant 1 : i32
    %107 = vector.broadcast %c1_i32 : i32 to vector<8x128xi32>
    %108 = arith.cmpi eq, %95, %107 : vector<8x128xi32>
    %109 = arith.andi %106, %108 : vector<8x128xi1>
    %cst_52 = arith.constant 0.000000e+00 : f32
    %110 = vector.shape_cast %93 : vector<1x1xf32> to vector<1x1xf32>
    %111 = vector.broadcast %110 : vector<1x1xf32> to vector<8x128xf32>
    %112 = vector.broadcast %cst_52 : f32 to vector<8x128xf32>
    %113 = arith.select %109, %111, %112 : vector<8x128xi1>, vector<8x128xf32>
    %114 = arith.addf %104, %113 : vector<8x128xf32>
    %c0_53 = arith.constant 0 : index
    %c0_54 = arith.constant 0 : index
    %115 = vector.load %arg10[%c0_53, %c0_54] : memref<8x128xf32, #tpu.memory_space<vmem>>, vector<8x128xf32>
    tpu.vector_store %arg10[%c0_53, %c0_54], %114 {strides = array<i32>} : memref<8x128xf32, #tpu.memory_space<vmem>>, vector<8x128xf32>,
    return
  }
  func.func @transform_0(%arg0: i32) -> (i32, i32, i32) {
    %c0_i32 = arith.constant 0 : i32
    %c0_i32_0 = arith.constant 0 : i32
    %c0_i32_1 = arith.constant 0 : i32
    return %arg0, %c0_i32, %c0_i32_0 : i32, i32, i32
  }
  func.func @transform_1(%arg0: i32) -> (i32, i32, i32) {
    %c0_i32 = arith.constant 0 : i32
    %c0_i32_0 = arith.constant 0 : i32
    %c0_i32_1 = arith.constant 0 : i32
    return %arg0, %c0_i32, %c0_i32_0 : i32, i32, i32
  }
  func.func @transform_2(%arg0: i32) -> (i32, i32, i32) {
    %c0_i32 = arith.constant 0 : i32
    %c0_i32_0 = arith.constant 0 : i32
    %c0_i32_1 = arith.constant 0 : i32
    return %arg0, %c0_i32, %c0_i32_0 : i32, i32, i32
  }
  func.func @transform_3(%arg0: i32) -> (i32, i32, i32) {
    %c0_i32 = arith.constant 0 : i32
    %c0_i32_0 = arith.constant 0 : i32
    %c0_i32_1 = arith.constant 0 : i32
    return %arg0, %c0_i32, %c0_i32_0 : i32, i32, i32
  }
  func.func @transform_4(%arg0: i32) -> (i32, i32, i32) {
    %c0_i32 = arith.constant 0 : i32
    %c0_i32_0 = arith.constant 0 : i32
    %c0_i32_1 = arith.constant 0 : i32
    return %arg0, %c0_i32, %c0_i32_0 : i32, i32, i32
  }
  func.func @transform_5(%arg0: i32) -> (i32, i32, i32) {
    %c0_i32 = arith.constant 0 : i32
    %c0_i32_0 = arith.constant 0 : i32
    %c0_i32_1 = arith.constant 0 : i32
    return %arg0, %c0_i32, %c0_i32_0 : i32, i32, i32
  }
  func.func @transform_6(%arg0: i32) -> (i32, i32, i32) {
    %c0_i32 = arith.constant 0 : i32
    %c0_i32_0 = arith.constant 0 : i32
    %c0_i32_1 = arith.constant 0 : i32
    return %arg0, %c0_i32, %c0_i32_0 : i32, i32, i32
  }
  func.func @transform_7(%arg0: i32) -> (i32, i32, i32) {
    %c0_i32 = arith.constant 0 : i32
    %c0_i32_0 = arith.constant 0 : i32
    %c0_i32_1 = arith.constant 0 : i32
    return %arg0, %c0_i32, %c0_i32_0 : i32, i32, i32
  }
  func.func @transform_8(%arg0: i32) -> (i32, i32, i32) {
    %c0_i32 = arith.constant 0 : i32
    %c0_i32_0 = arith.constant 0 : i32
    %c0_i32_1 = arith.constant 0 : i32
    return %arg0, %c0_i32, %c0_i32_0 : i32, i32, i32
  }
  func.func @transform_9(%arg0: i32) -> (i32, i32) {
    %c0_i32 = arith.constant 0 : i32
    %c0_i32_0 = arith.constant 0 : i32
    return %arg0, %c0_i32 : i32, i32
  }
}

</mosaic_0001>

<llo_original>
// kernel: tpu_custom_call.1
$region0: #{tpu_custom_call.1}
  #allocation0 [shape = 'u32[]', space=smem, size = 0x4, offset = 0x4, fixed_abs, tag = 'smem constant byte address 0x4 - core index']
  #allocation1 [shape = 'u32[144,128]{1,0:T(1,128)}', space=vmem, size = 0x12000, scoped, tag = 'internal scratch']
  %s0 = inlined_call_operand.vmem [shape: f32[2,8,128], index: 0, kind: input, shape index: {}]
  %s1 = inlined_call_operand.vmem [shape: f32[2,8,128], index: 1, kind: input, shape index: {}]
  %s2 = inlined_call_operand.vmem [shape: f32[2,128,32], index: 2, kind: input, shape index: {}]
  %s3 = inlined_call_operand.vmem [shape: f32[2,16,128], index: 3, kind: input, shape index: {}]
  %s4 = inlined_call_operand.vmem [shape: f32[2,32,16], index: 4, kind: input, shape index: {}]
  %s5 = inlined_call_operand.vmem [shape: f32[2,16,16], index: 5, kind: input, shape index: {}]
  %s6 = inlined_call_operand.vmem [shape: f32[2,8,16], index: 6, kind: input, shape index: {}]
  %s7 = inlined_call_operand.vmem [shape: f32[2,1,64], index: 7, kind: input, shape index: {}]
  %s8 = inlined_call_operand.vmem [shape: f32[2,8,8], index: 8, kind: input, shape index: {}]
  %s9 = inlined_call_operand.hbm [shape: f32[16,128], index: 9, kind: output, shape index: {}]
  %s10 = sld [smem:[#allocation0]]
  $region69: #{tpu_custom_call.1} parent=0
    _
  %s12 = ssub.s32 1, %s10
  %s13 = scalar_select 0, %s12, %s10
  $region1: #{tpu_custom_call.1} parent=0
    #allocation2 [shape = 'u8[8192]{0}', space=vmem, size = 0x2000, scoped, tag = 'output window, operand 0']
    #allocation3 [shape = 's32[2]{0}', space=sflag, size = 0x8, scoped, tag = 'scoped memory for tpu_custom_call.1']
    %14 = vsyncpa [#allocation3], 0
    %s15 = scalar_lea.sflag [#allocation3], 1
    %16 = vsyncpa %s15, 0
    loop: start=0, step=1, limit=4
    $region2: #{tpu_custom_call.1} parent=1 // loop_pre_header
      _
    $region3: #{tpu_custom_call.1} parent=1 // loop_header
      %s18 = sphi 0, %s22
      %p19 = scmp.ge.s32.totalorder %s18, 4
      %s28 = sphi 0, %s30
      %s31 = sphi 0, %s28
      %s32 = sphi 0, %s31
      %s48 = sphi 0, %s32
      %s54 = sphi 0, %s56
      %s57 = sphi 0, %s54
      %s58 = sphi 0, %s57
      %s74 = sphi 0, %s58
      %s80 = sphi 0, %s82
      %s83 = sphi 0, %s80
      %s84 = sphi 0, %s83
      %s100 = sphi 0, %s84
      %s106 = sphi 0, %s108
      %s109 = sphi 0, %s106
      %s110 = sphi 0, %s109
      %s126 = sphi 0, %s110
      %s132 = sphi 0, %s134
      %s135 = sphi 0, %s132
      %s136 = sphi 0, %s135
      %s152 = sphi 0, %s136
      %s158 = sphi 0, %s160
      %s161 = sphi 0, %s158
      %s162 = sphi 0, %s161
      %s178 = sphi 0, %s162
      %s184 = sphi 0, %s186
      %s187 = sphi 0, %s184
      %s188 = sphi 0, %s187
      %s204 = sphi 0, %s188
      %s210 = sphi 0, %s212
      %s213 = sphi 0, %s210
      %s214 = sphi 0, %s213
      %s230 = sphi 0, %s214
      %s236 = sphi 0, %s238
      %s239 = sphi 0, %s236
      %s240 = sphi 0, %s239
      %s256 = sphi 0, %s240
      %s262 = sphi 0, %s264
      %s265 = sphi 0, %s262
      %s266 = sphi 0, %s265
      %s282 = sphi 0, %s266
    $region4: #{tpu_custom_call.1} parent=1 // loop_header_branch
      %21 = sbr.rel (%p19) target = $region8
    $region5: #{tpu_custom_call.1} parent=1 // loop_body
      %s23 = ssub.s32 %s18, 1
      %s24 = ssub.s32 %s18, 2
      %s25 = sadd.s32 %s18, 1
      %s26 = ssub.s32 %s18, %s25
      %p27 = scmp.eq.s32.totalorder %s26, 0
      %s29 = sadd.s32 %s28, 1
      %s30 = scalar_select %p27, %s28, %s29
      %p33 = pneg %p27
      %p34 = scmp.eq.s32.totalorder %s18, 1
      %p35 = por %p33, %p34
      %p36 = scmp.ne.s32.totalorder %s28, %s31
      %p37 = scmp.eq.s32.totalorder %s18, 0
      %p38 = por %p36, %p37
      %p39 = scmp.ne.s32.totalorder %s28, %s31
      %p40 = scmp.eq.s32.totalorder %s23, 1
      %p41 = por %p39, %p40
      %p42 = scmp.ne.s32.totalorder %s31, %s32
      %p43 = scmp.eq.s32.totalorder %s23, 0
      %p44 = por %p42, %p43
      %p45 = scmp.ne.s32.totalorder %s31, %s32
      %p46 = scmp.eq.s32.totalorder %s24, 1
      %p47 = por %p45, %p46
      %p49 = scmp.ne.s32.totalorder %s32, %s48
      %p50 = scmp.eq.s32.totalorder %s24, 0
      %p51 = por %p49, %p50
      %s52 = ssub.s32 %s18, %s25
      %p53 = scmp.eq.s32.totalorder %s52, 0
      %s55 = sadd.s32 %s54, 1
      %s56 = scalar_select %p53, %s54, %s55
      %p59 = pneg %p53
      %p60 = scmp.eq.s32.totalorder %s18, 1
      %p61 = por %p59, %p60
      %p62 = scmp.ne.s32.totalorder %s54, %s57
      %p63 = scmp.eq.s32.totalorder %s18, 0
      %p64 = por %p62, %p63
      %p65 = scmp.ne.s32.totalorder %s54, %s57
      %p66 = scmp.eq.s32.totalorder %s23, 1
      %p67 = por %p65, %p66
      %p68 = scmp.ne.s32.totalorder %s57, %s58
      %p69 = scmp.eq.s32.totalorder %s23, 0
      %p70 = por %p68, %p69
      %p71 = scmp.ne.s32.totalorder %s57, %s58
      %p72 = scmp.eq.s32.totalorder %s24, 1
      %p73 = por %p71, %p72
      %p75 = scmp.ne.s32.totalorder %s58, %s74
      %p76 = scmp.eq.s32.totalorder %s24, 0
      %p77 = por %p75, %p76
      %s78 = ssub.s32 %s18, %s25
      %p79 = scmp.eq.s32.totalorder %s78, 0
      %s81 = sadd.s32 %s80, 1
      %s82 = scalar_select %p79, %s80, %s81
      %p85 = pneg %p79
      %p86 = scmp.eq.s32.totalorder %s18, 1
      %p87 = por %p85, %p86
      %p88 = scmp.ne.s32.totalorder %s80, %s83
      %p89 = scmp.eq.s32.totalorder %s18, 0
      %p90 = por %p88, %p89
      %p91 = scmp.ne.s32.totalorder %s80, %s83
      %p92 = scmp.eq.s32.totalorder %s23, 1
      %p93 = por %p91, %p92
      %p94 = scmp.ne.s32.totalorder %s83, %s84
      %p95 = scmp.eq.s32.totalorder %s23, 0
      %p96 = por %p94, %p95
      %p97 = scmp.ne.s32.totalorder %s83, %s84
      %p98 = scmp.eq.s32.totalorder %s24, 1
      %p99 = por %p97, %p98
      %p101 = scmp.ne.s32.totalorder %s84, %s100
      %p102 = scmp.eq.s32.totalorder %s24, 0
      %p103 = por %p101, %p102
      %s104 = ssub.s32 %s18, %s25
      %p105 = scmp.eq.s32.totalorder %s104, 0
      %s107 = sadd.s32 %s106, 1
      %s108 = scalar_select %p105, %s106, %s107
      %p111 = pneg %p105
      %p112 = scmp.eq.s32.totalorder %s18, 1
      %p113 = por %p111, %p112
      %p114 = scmp.ne.s32.totalorder %s106, %s109
      %p115 = scmp.eq.s32.totalorder %s18, 0
      %p116 = por %p114, %p115
      %p117 = scmp.ne.s32.totalorder %s106, %s109
      %p118 = scmp.eq.s32.totalorder %s23, 1
      %p119 = por %p117, %p118
      %p120 = scmp.ne.s32.totalorder %s109, %s110
      %p121 = scmp.eq.s32.totalorder %s23, 0
      %p122 = por %p120, %p121
      %p123 = scmp.ne.s32.totalorder %s109, %s110
      %p124 = scmp.eq.s32.totalorder %s24, 1
      %p125 = por %p123, %p124
      %p127 = scmp.ne.s32.totalorder %s110, %s126
      %p128 = scmp.eq.s32.totalorder %s24, 0
      %p129 = por %p127, %p128
      %s130 = ssub.s32 %s18, %s25
      %p131 = scmp.eq.s32.totalorder %s130, 0
      %s133 = sadd.s32 %s132, 1
      %s134 = scalar_select %p131, %s132, %s133
      %p137 = pneg %p131
      %p138 = scmp.eq.s32.totalorder %s18, 1
      %p139 = por %p137, %p138
      %p140 = scmp.ne.s32.totalorder %s132, %s135
      %p141 = scmp.eq.s32.totalorder %s18, 0
      %p142 = por %p140, %p141
      %p143 = scmp.ne.s32.totalorder %s132, %s135
      %p144 = scmp.eq.s32.totalorder %s23, 1
      %p145 = por %p143, %p144
      %p146 = scmp.ne.s32.totalorder %s135, %s136
      %p147 = scmp.eq.s32.totalorder %s23, 0
      %p148 = por %p146, %p147
      %p149 = scmp.ne.s32.totalorder %s135, %s136
      %p150 = scmp.eq.s32.totalorder %s24, 1
      %p151 = por %p149, %p150
      %p153 = scmp.ne.s32.totalorder %s136, %s152
      %p154 = scmp.eq.s32.totalorder %s24, 0
      %p155 = por %p153, %p154
      %s156 = ssub.s32 %s18, %s25
      %p157 = scmp.eq.s32.totalorder %s156, 0
      %s159 = sadd.s32 %s158, 1
      %s160 = scalar_select %p157, %s158, %s159
      %p163 = pneg %p157
      %p164 = scmp.eq.s32.totalorder %s18, 1
      %p165 = por %p163, %p164
      %p166 = scmp.ne.s32.totalorder %s158, %s161
      %p167 = scmp.eq.s32.totalorder %s18, 0
      %p168 = por %p166, %p167
      %p169 = scmp.ne.s32.totalorder %s158, %s161
      %p170 = scmp.eq.s32.totalorder %s23, 1
      %p171 = por %p169, %p170
      %p172 = scmp.ne.s32.totalorder %s161, %s162
      %p173 = scmp.eq.s32.totalorder %s23, 0
      %p174 = por %p172, %p173
      %p175 = scmp.ne.s32.totalorder %s161, %s162
      %p176 = scmp.eq.s32.totalorder %s24, 1
      %p177 = por %p175, %p176
      %p179 = scmp.ne.s32.totalorder %s162, %s178
      %p180 = scmp.eq.s32.totalorder %s24, 0
      %p181 = por %p179, %p180
      %s182 = ssub.s32 %s18, %s25
      %p183 = scmp.eq.s32.totalorder %s182, 0
      %s185 = sadd.s32 %s184, 1
      %s186 = scalar_select %p183, %s184, %s185
      %p189 = pneg %p183
      %p190 = scmp.eq.s32.totalorder %s18, 1
      %p191 = por %p189, %p190
      %p192 = scmp.ne.s32.totalorder %s184, %s187
      %p193 = scmp.eq.s32.totalorder %s18, 0
      %p194 = por %p192, %p193
      %p195 = scmp.ne.s32.totalorder %s184, %s187
      %p196 = scmp.eq.s32.totalorder %s23, 1
      %p197 = por %p195, %p196
      %p198 = scmp.ne.s32.totalorder %s187, %s188
      %p199 = scmp.eq.s32.totalorder %s23, 0
      %p200 = por %p198, %p199
      %p201 = scmp.ne.s32.totalorder %s187, %s188
      %p202 = scmp.eq.s32.totalorder %s24, 1
      %p203 = por %p201, %p202
      %p205 = scmp.ne.s32.totalorder %s188, %s204
      %p206 = scmp.eq.s32.totalorder %s24, 0
      %p207 = por %p205, %p206
      %s208 = ssub.s32 %s18, %s25
      %p209 = scmp.eq.s32.totalorder %s208, 0
      %s211 = sadd.s32 %s210, 1
      %s212 = scalar_select %p209, %s210, %s211
      %p215 = pneg %p209
      %p216 = scmp.eq.s32.totalorder %s18, 1
      %p217 = por %p215, %p216
      %p218 = scmp.ne.s32.totalorder %s210, %s213
      %p219 = scmp.eq.s32.totalorder %s18, 0
      %p220 = por %p218, %p219
      %p221 = scmp.ne.s32.totalorder %s210, %s213
      %p222 = scmp.eq.s32.totalorder %s23, 1
      %p223 = por %p221, %p222
      %p224 = scmp.ne.s32.totalorder %s213, %s214
      %p225 = scmp.eq.s32.totalorder %s23, 0
      %p226 = por %p224, %p225
      %p227 = scmp.ne.s32.totalorder %s213, %s214
      %p228 = scmp.eq.s32.totalorder %s24, 1
      %p229 = por %p227, %p228
      %p231 = scmp.ne.s32.totalorder %s214, %s230
      %p232 = scmp.eq.s32.totalorder %s24, 0
      %p233 = por %p231, %p232
      %s234 = ssub.s32 %s18, %s25
      %p235 = scmp.eq.s32.totalorder %s234, 0
      %s237 = sadd.s32 %s236, 1
      %s238 = scalar_select %p235, %s236, %s237
      %p241 = pneg %p235
      %p242 = scmp.eq.s32.totalorder %s18, 1
      %p243 = por %p241, %p242
      %p244 = scmp.ne.s32.totalorder %s236, %s239
      %p245 = scmp.eq.s32.totalorder %s18, 0
      %p246 = por %p244, %p245
      %p247 = scmp.ne.s32.totalorder %s236, %s239
      %p248 = scmp.eq.s32.totalorder %s23, 1
      %p249 = por %p247, %p248
      %p250 = scmp.ne.s32.totalorder %s239, %s240
      %p251 = scmp.eq.s32.totalorder %s23, 0
      %p252 = por %p250, %p251
      %p253 = scmp.ne.s32.totalorder %s239, %s240
      %p254 = scmp.eq.s32.totalorder %s24, 1
      %p255 = por %p253, %p254
      %p257 = scmp.ne.s32.totalorder %s240, %s256
      %p258 = scmp.eq.s32.totalorder %s24, 0
      %p259 = por %p257, %p258
      %s260 = ssub.s32 %s18, %s25
      %p261 = scmp.eq.s32.totalorder %s260, 0
      %s263 = sadd.s32 %s262, 1
      %s264 = scalar_select %p261, %s262, %s263
      %p267 = pneg %p261
      %p268 = scmp.eq.s32.totalorder %s18, 1
      %p269 = por %p267, %p268
      %p270 = scmp.ne.s32.totalorder %s262, %s265
      %p271 = scmp.eq.s32.totalorder %s18, 0
      %p272 = por %p270, %p271
      %p273 = scmp.ne.s32.totalorder %s262, %s265
      %p274 = scmp.eq.s32.totalorder %s23, 1
      %p275 = por %p273, %p274
      %p276 = scmp.ne.s32.totalorder %s265, %s266
      %p277 = scmp.eq.s32.totalorder %s23, 0
      %p278 = por %p276, %p277
      %p279 = scmp.ne.s32.totalorder %s265, %s266
      %p280 = scmp.eq.s32.totalorder %s24, 1
      %p281 = por %p279, %p280
      %p283 = scmp.ne.s32.totalorder %s266, %s282
      %p284 = scmp.eq.s32.totalorder %s24, 0
      %p285 = por %p283, %p284
      %p286 = scmp.le.s32.totalorder 1, %s18
      %p287 = scmp.lt.s32.totalorder %s18, 3
      %p288 = pnand %p286, %p287
      %p289 = pneg %p288
      // Predicated region
      $region9: #{tpu_custom_call.1} parent=5 // pred_check
        _
      $region10: #{tpu_custom_call.1} parent=5 // pred_check_branch
        %291 = sbr.rel (%p288) target = $region12
      $region11: #{tpu_custom_call.1} parent=5 // pred_region
        %s292 = ssub.s32 %s18, 1
      $region12: #{tpu_custom_call.1} parent=5 // pred_fallthru
        _
      %p293 = scmp.lt.s32.totalorder %s18, 2
      // Predicated region
      $region13: #{tpu_custom_call.1} parent=5 // pred_check
        %p294 = pneg %p293
      $region14: #{tpu_custom_call.1} parent=5 // pred_check_branch
        %296 = sbr.rel (%p294) target = $region16
      $region15: #{tpu_custom_call.1} parent=5 // pred_region
        // Predicated region
        $region17: #{tpu_custom_call.1} parent=15 // pred_check
          %p297 = pneg %p38
        $region18: #{tpu_custom_call.1} parent=15 // pred_check_branch
          %299 = sbr.rel (%p297) target = $region20
        $region19: #{tpu_custom_call.1} parent=15 // pred_region
          %p300 = scmp.lt.s32.totalorder %s18, 1
          %s301 = scalar_select %p300, %s18, 1
          %s302 = smul.addr %s301, 8
          %s303 = scalar_lea.vmem %s0, %s302
        $region20: #{tpu_custom_call.1} parent=15 // pred_fallthru
          _
        // Predicated region
        $region21: #{tpu_custom_call.1} parent=15 // pred_check
          %p304 = pneg %p64
        $region22: #{tpu_custom_call.1} parent=15 // pred_check_branch
          %306 = sbr.rel (%p304) target = $region24
        $region23: #{tpu_custom_call.1} parent=15 // pred_region
          %p307 = scmp.lt.s32.totalorder %s18, 1
          %s308 = scalar_select %p307, %s18, 1
          %s309 = smul.addr %s308, 8
          %s310 = scalar_lea.vmem %s1, %s309
        $region24: #{tpu_custom_call.1} parent=15 // pred_fallthru
          _
        // Predicated region
        $region25: #{tpu_custom_call.1} parent=15 // pred_check
          %p311 = pneg %p90
        $region26: #{tpu_custom_call.1} parent=15 // pred_check_branch
          %313 = sbr.rel (%p311) target = $region28
        $region27: #{tpu_custom_call.1} parent=15 // pred_region
          %p314 = scmp.lt.s32.totalorder %s18, 1
          %s315 = scalar_select %p314, %s18, 1
          %s316 = smul.addr %s315, 16
          %s317 = smul.addr %s316, 8
          %s318 = scalar_lea.vmem %s2, %s317
        $region28: #{tpu_custom_call.1} parent=15 // pred_fallthru
          _
        // Predicated region
        $region29: #{tpu_custom_call.1} parent=15 // pred_check
          %p319 = pneg %p116
        $region30: #{tpu_custom_call.1} parent=15 // pred_check_branch
          %321 = sbr.rel (%p319) target = $region32
        $region31: #{tpu_custom_call.1} parent=15 // pred_region
          %p322 = scmp.lt.s32.totalorder %s18, 1
          %s323 = scalar_select %p322, %s18, 1
          %s324 = smul.addr %s323, 2
          %s325 = smul.addr %s324, 8
          %s326 = scalar_lea.vmem %s3, %s325
        $region32: #{tpu_custom_call.1} parent=15 // pred_fallthru
          _
        // Predicated region
        $region33: #{tpu_custom_call.1} parent=15 // pred_check
          %p327 = pneg %p142
        $region34: #{tpu_custom_call.1} parent=15 // pred_check_branch
          %329 = sbr.rel (%p327) target = $region36
        $region35: #{tpu_custom_call.1} parent=15 // pred_region
          %p330 = scmp.lt.s32.totalorder %s18, 1
          %s331 = scalar_select %p330, %s18, 1
          %s332 = smul.addr %s331, 4
          %s333 = smul.addr %s332, 8
          %s334 = scalar_lea.vmem %s4, %s333
        $region36: #{tpu_custom_call.1} parent=15 // pred_fallthru
          _
        // Predicated region
        $region37: #{tpu_custom_call.1} parent=15 // pred_check
          %p335 = pneg %p168
        $region38: #{tpu_custom_call.1} parent=15 // pred_check_branch
          %337 = sbr.rel (%p335) target = $region40
        $region39: #{tpu_custom_call.1} parent=15 // pred_region
          %p338 = scmp.lt.s32.totalorder %s18, 1
          %s339 = scalar_select %p338, %s18, 1
          %s340 = smul.addr %s339, 2
          %s341 = smul.addr %s340, 8
          %s342 = scalar_lea.vmem %s5, %s341
        $region40: #{tpu_custom_call.1} parent=15 // pred_fallthru
          _
        // Predicated region
        $region41: #{tpu_custom_call.1} parent=15 // pred_check
          %p343 = pneg %p194
        $region42: #{tpu_custom_call.1} parent=15 // pred_check_branch
          %345 = sbr.rel (%p343) target = $region44
        $region43: #{tpu_custom_call.1} parent=15 // pred_region
          %p346 = scmp.lt.s32.totalorder %s18, 1
          %s347 = scalar_select %p346, %s18, 1
          %s348 = smul.addr %s347, 8
          %s349 = scalar_lea.vmem %s6, %s348
        $region44: #{tpu_custom_call.1} parent=15 // pred_fallthru
          _
        // Predicated region
        $region45: #{tpu_custom_call.1} parent=15 // pred_check
          %p350 = pneg %p220
        $region46: #{tpu_custom_call.1} parent=15 // pred_check_branch
          %352 = sbr.rel (%p350) target = $region48
        $region47: #{tpu_custom_call.1} parent=15 // pred_region
          %p353 = scmp.lt.s32.totalorder %s18, 1
          %s354 = scalar_select %p353, %s18, 1
          %s355 = scalar_lea.vmem %s7, %s354
        $region48: #{tpu_custom_call.1} parent=15 // pred_fallthru
          _
        // Predicated region
        $region49: #{tpu_custom_call.1} parent=15 // pred_check
          %p356 = pneg %p246
        $region50: #{tpu_custom_call.1} parent=15 // pred_check_branch
          %358 = sbr.rel (%p356) target = $region52
        $region51: #{tpu_custom_call.1} parent=15 // pred_region
          %p359 = scmp.lt.s32.totalorder %s18, 1
          %s360 = scalar_select %p359, %s18, 1
          %s361 = smul.addr %s360, 8
          %s362 = scalar_lea.vmem %s8, %s361
        $region52: #{tpu_custom_call.1} parent=15 // pred_fallthru
          _
      $region16: #{tpu_custom_call.1} parent=5 // pred_fallthru
        _
      %p363 = scmp.le.s32.totalorder 1, %s18
      %p364 = scmp.lt.s32.totalorder %s18, 3
      %p365 = pnand %p363, %p364
      %p366 = pneg %p365
      // Predicated region
      $region53: #{tpu_custom_call.1} parent=5 // pred_check
        _
      $region54: #{tpu_custom_call.1} parent=5 // pred_check_branch
        %368 = sbr.rel (%p365) target = $region56
      $region55: #{tpu_custom_call.1} parent=5 // pred_region
        %s369 = ssub.s32 %s18, 1
        %p370 = scmp.lt.s32.totalorder %s23, 1
        %s371 = scalar_select %p370, %s23, 1
        %s372 = smul.addr %s371, 8
        %s373 = scalar_lea.vmem %s0, %s372
        %p374 = pneg %p44
        %p375 = pneg %p41
        %p376 = scmp.lt.s32.totalorder %s23, 1
        %s377 = scalar_select %p376, %s23, 1
        %s378 = smul.addr %s377, 8
        %s379 = scalar_lea.vmem %s1, %s378
        %p380 = pneg %p70
        %p381 = pneg %p67
        %p382 = scmp.lt.s32.totalorder %s23, 1
        %s383 = scalar_select %p382, %s23, 1
        %s384 = smul.addr %s383, 16
        %s385 = smul.addr %s384, 8
        %s386 = scalar_lea.vmem %s2, %s385
        %p387 = pneg %p96
        %p388 = pneg %p93
        %p389 = scmp.lt.s32.totalorder %s23, 1
        %s390 = scalar_select %p389, %s23, 1
        %s391 = smul.addr %s390, 2
        %s392 = smul.addr %s391, 8
        %s393 = scalar_lea.vmem %s3, %s392
        %p394 = pneg %p122
        %p395 = pneg %p119
        %p396 = scmp.lt.s32.totalorder %s23, 1
        %s397 = scalar_select %p396, %s23, 1
        %s398 = smul.addr %s397, 4
        %s399 = smul.addr %s398, 8
        %s400 = scalar_lea.vmem %s4, %s399
        %p401 = pneg %p148
        %p402 = pneg %p145
        %p403 = scmp.lt.s32.totalorder %s23, 1
        %s404 = scalar_select %p403, %s23, 1
        %s405 = smul.addr %s404, 2
        %s406 = smul.addr %s405, 8
        %s407 = scalar_lea.vmem %s5, %s406
        %p408 = pneg %p174
        %p409 = pneg %p171
        %p410 = scmp.lt.s32.totalorder %s23, 1
        %s411 = scalar_select %p410, %s23, 1
        %s412 = smul.addr %s411, 8
        %s413 = scalar_lea.vmem %s6, %s412
        %p414 = pneg %p200
        %p415 = pneg %p197
        %p416 = scmp.lt.s32.totalorder %s23, 1
        %s417 = scalar_select %p416, %s23, 1
        %s418 = scalar_lea.vmem %s7, %s417
        %p419 = pneg %p226
        %p420 = pneg %p223
        %p421 = scmp.lt.s32.totalorder %s23, 1
        %s422 = scalar_select %p421, %s23, 1
        %s423 = smul.addr %s422, 8
        %s424 = scalar_lea.vmem %s8, %s423
        %p425 = pneg %p252
        %p426 = pneg %p249
        %p427 = pneg %p278
        %p428 = pneg %p275
        %s429 = sand.u32 %s265, 1
        %s430 = scalar_lea.sflag [#allocation3], %s429
        %s431 = sand.u32 %s265, 1
        %s432 = smul.addr %s431, 8
        %s433 = scalar_lea.vmem [#allocation2], %s432
        %p434 = scmp.lt.s32.totalorder %s23, 1
        %s435 = scalar_select %p434, %s23, 1
        %s436 = smul.addr %s435, 8
        %s437 = scalar_lea.vmem %s0, %s436
        %p438 = scmp.lt.s32.totalorder %s23, 1
        %s439 = scalar_select %p438, %s23, 1
        %s440 = smul.addr %s439, 8
        %s441 = scalar_lea.vmem %s1, %s440
        %p442 = scmp.lt.s32.totalorder %s23, 1
        %s443 = scalar_select %p442, %s23, 1
        %s444 = smul.addr %s443, 16
        %s445 = smul.addr %s444, 8
        %s446 = scalar_lea.vmem %s2, %s445
        %p447 = scmp.lt.s32.totalorder %s23, 1
        %s448 = scalar_select %p447, %s23, 1
        %s449 = smul.addr %s448, 2
        %s450 = smul.addr %s449, 8
        %s451 = scalar_lea.vmem %s3, %s450
        %p452 = scmp.lt.s32.totalorder %s23, 1
        %s453 = scalar_select %p452, %s23, 1
        %s454 = smul.addr %s453, 4
        %s455 = smul.addr %s454, 8
        %s456 = scalar_lea.vmem %s4, %s455
        %p457 = scmp.lt.s32.totalorder %s23, 1
        %s458 = scalar_select %p457, %s23, 1
        %s459 = smul.addr %s458, 2
        %s460 = smul.addr %s459, 8
        %s461 = scalar_lea.vmem %s5, %s460
        %p462 = scmp.lt.s32.totalorder %s23, 1
        %s463 = scalar_select %p462, %s23, 1
        %s464 = smul.addr %s463, 8
        %s465 = scalar_lea.vmem %s6, %s464
        %p466 = scmp.lt.s32.totalorder %s23, 1
        %s467 = scalar_select %p466, %s23, 1
        %s468 = scalar_lea.vmem %s7, %s467
        %p469 = scmp.lt.s32.totalorder %s23, 1
        %s470 = scalar_select %p469, %s23, 1
        %s471 = smul.addr %s470, 8
        %s472 = scalar_lea.vmem %s8, %s471
        %v473 = vld [vmem:[%s468] sm:$0x1]
        %v474 = vld [vmem:[%s441] sm:$0xff]
        %v475 = vld [vmem:[%s446] sm:$0xff]
        %v476 = vld [vmem:[%s446 + $0x8] sm:$0xff]
        %v477 = vld [vmem:[%s446 + $0x10] sm:$0xff]
        %v478 = vld [vmem:[%s446 + $0x18] sm:$0xff]
        %v479 = vld [vmem:[%s446 + $0x20] sm:$0xff]
        %v480 = vld [vmem:[%s446 + $0x28] sm:$0xff]
        %v481 = vld [vmem:[%s446 + $0x30] sm:$0xff]
        %v482 = vld [vmem:[%s446 + $0x38] sm:$0xff]
        %v483 = vld [vmem:[%s446 + $0x40] sm:$0xff]
        %v484 = vld [vmem:[%s446 + $0x48] sm:$0xff]
        %v485 = vld [vmem:[%s446 + $0x50] sm:$0xff]
        %v486 = vld [vmem:[%s446 + $0x58] sm:$0xff]
        %v487 = vld [vmem:[%s446 + $0x60] sm:$0xff]
        %v488 = vld [vmem:[%s446 + $0x68] sm:$0xff]
        %v489 = vld [vmem:[%s446 + $0x70] sm:$0xff]
        %v490 = vld [vmem:[%s446 + $0x78] sm:$0xff]
        %v492 = vlaneseq
        %v493 = vshrl.u32 %v492, 7
        %v494 = vsub.s32 0, %v493
        %v495 = vrot.slane %v473, %v494
        %497 = vmatprep.subr.mxu0 0.0
        %498 = vmatpush1.msra.mxu0 %v475
        %499 = vmatprep.subr.mxu0 0.0
        %500 = vmatpush1.msra.mxu0 %v476
        %501 = vmatprep.subr.mxu0 0.0
        %502 = vmatpush1.msra.mxu0 %v477
        %503 = vmatprep.subr.mxu0 0.0
        %504 = vmatpush1.msra.mxu0 %v478
        %505 = vmatprep.subr.mxu0 0.0
        %506 = vmatpush1.msra.mxu0 %v479
        %507 = vmatprep.subr.mxu0 0.0
        %508 = vmatpush1.msra.mxu0 %v480
        %509 = vmatprep.subr.mxu0 0.0
        %510 = vmatpush1.msra.mxu0 %v481
        %511 = vmatprep.subr.mxu0 0.0
        %512 = vmatpush1.msra.mxu0 %v482
        %513 = vmatprep.subr.mxu0 0.0
        %514 = vmatpush1.msra.mxu0 %v483
        %515 = vmatprep.subr.mxu0 0.0
        %516 = vmatpush1.msra.mxu0 %v484
        %517 = vmatprep.subr.mxu0 0.0
        %518 = vmatpush1.msra.mxu0 %v485
        %519 = vmatprep.subr.mxu0 0.0
        %520 = vmatpush1.msra.mxu0 %v486
        %521 = vmatprep.subr.mxu0 0.0
        %522 = vmatpush1.msra.mxu0 %v487
        %523 = vmatprep.subr.mxu0 0.0
        %524 = vmatpush1.msra.mxu0 %v488
        %525 = vmatprep.subr.mxu0 0.0
        %526 = vmatpush1.msra.mxu0 %v489
        %527 = vmatprep.subr.mxu0 0.0
        %528 = vmatpush1.msra.mxu0 %v490
        %529 = vmatprep.subr.mxu0 0.0
        %530 = vmatpush1.msra.mxu0 0.0
        %531 = vmatprep.subr.mxu0 0.0
        %532 = vmatpush1.msra.mxu0 0.0
        %533 = vmatprep.subr.mxu0 0.0
        %534 = vmatpush1.msra.mxu0 0.0
        %535 = vmatprep.subr.mxu0 0.0
        %536 = vmatpush1.msra.mxu0 0.0
        %537 = vmatprep.subr.mxu0 0.0
        %538 = vmatpush1.msra.mxu0 0.0
        %539 = vmatprep.subr.mxu0 0.0
        %540 = vmatpush1.msra.mxu0 0.0
        %541 = vmatprep.subr.mxu0 0.0
        %542 = vmatpush1.msra.mxu0 0.0
        %543 = vmatprep.subr.mxu0 0.0
        %544 = vmatpush1.msra.mxu0 0.0
        %545 = vmatprep.subr.mxu0 0.0
        %546 = vmatpush1.msra.mxu0 0.0
        %547 = vmatprep.subr.mxu0 0.0
        %548 = vmatpush1.msra.mxu0 0.0
        %549 = vmatprep.subr.mxu0 0.0
        %550 = vmatpush1.msra.mxu0 0.0
        %551 = vmatprep.subr.mxu0 0.0
        %552 = vmatpush1.msra.mxu0 0.0
        %553 = vmatprep.subr.mxu0 0.0
        %554 = vmatpush1.msra.mxu0 0.0
        %555 = vmatprep.subr.mxu0 0.0
        %556 = vmatpush1.msra.mxu0 0.0
        %557 = vmatprep.subr.mxu0 0.0
        %558 = vmatpush1.msra.mxu0 0.0
        %559 = vmatprep.subr.mxu0 0.0
        %560 = vmatpush1.msra.mxu0 0.0
        %561 = vmatprep.mubr.f32.mxu0 0.0
        %562 = vmatmul.mubr.f32.gmra.mrb[0].mxu0 %v474
        %v563 = vpop.f32.mrb[0].mxu0
        %v564 = vadd.f32 %v495, %v563
        %v565 = vpop.f32.mrb[0].mxu0
        %566 = vdwg.mxu0
        %v567 = vmax.f32 %v564, 0.0
        %v568 = vld [vmem:[%s456] sm:$0xff]
        %v569 = vld [vmem:[%s456 + $0x8] sm:$0xff]
        %v570 = vld [vmem:[%s456 + $0x10] sm:$0xff]
        %v571 = vld [vmem:[%s456 + $0x18] sm:$0xff]
        %572 = vrot.lane.b32.xlu0 %v495, 96
        %v573 = vpop.permute.xlu0 %572
        %vm575 = vcmask 261120
        %v577 = vsel %vm575, %v567, 0
        %579 = vmatprep.subr.mxu0 0.0
        %580 = vmatpush1.msra.mxu0 %v568
        %581 = vmatprep.subr.mxu0 0.0
        %582 = vmatpush1.msra.mxu0 %v569
        %583 = vmatprep.subr.mxu0 0.0
        %584 = vmatpush1.msra.mxu0 %v570
        %585 = vmatprep.subr.mxu0 0.0
        %586 = vmatpush1.msra.mxu0 %v571
        %587 = vmatprep.subr.mxu0 0.0
        %588 = vmatpush1.msra.mxu0 0.0
        %589 = vmatprep.subr.mxu0 0.0
        %590 = vmatpush1.msra.mxu0 0.0
        %591 = vmatprep.subr.mxu0 0.0
        %592 = vmatpush1.msra.mxu0 0.0
        %593 = vmatprep.subr.mxu0 0.0
        %594 = vmatpush1.msra.mxu0 0.0
        %595 = vmatprep.subr.mxu0 0.0
        %596 = vmatpush1.msra.mxu0 0.0
        %597 = vmatprep.subr.mxu0 0.0
        %598 = vmatpush1.msra.mxu0 0.0
        %599 = vmatprep.subr.mxu0 0.0
        %600 = vmatpush1.msra.mxu0 0.0
        %601 = vmatprep.subr.mxu0 0.0
        %602 = vmatpush1.msra.mxu0 0.0
        %603 = vmatprep.subr.mxu0 0.0
        %604 = vmatpush1.msra.mxu0 0.0
        %605 = vmatprep.subr.mxu0 0.0
        %606 = vmatpush1.msra.mxu0 0.0
        %607 = vmatprep.subr.mxu0 0.0
        %608 = vmatpush1.msra.mxu0 0.0
        %609 = vmatprep.subr.mxu0 0.0
        %610 = vmatpush1.msra.mxu0 0.0
        %611 = vmatprep.subr.mxu0 0.0
        %612 = vmatpush1.msra.mxu0 0.0
        %613 = vmatprep.subr.mxu0 0.0
        %614 = vmatpush1.msra.mxu0 0.0
        %615 = vmatprep.subr.mxu0 0.0
        %616 = vmatpush1.msra.mxu0 0.0
        %617 = vmatprep.subr.mxu0 0.0
        %618 = vmatpush1.msra.mxu0 0.0
        %619 = vmatprep.subr.mxu0 0.0
        %620 = vmatpush1.msra.mxu0 0.0
        %621 = vmatprep.subr.mxu0 0.0
        %622 = vmatpush1.msra.mxu0 0.0
        %623 = vmatprep.subr.mxu0 0.0
        %624 = vmatpush1.msra.mxu0 0.0
        %625 = vmatprep.subr.mxu0 0.0
        %626 = vmatpush1.msra.mxu0 0.0
        %627 = vmatprep.subr.mxu0 0.0
        %628 = vmatpush1.msra.mxu0 0.0
        %629 = vmatprep.subr.mxu0 0.0
        %630 = vmatpush1.msra.mxu0 0.0
        %631 = vmatprep.subr.mxu0 0.0
        %632 = vmatpush1.msra.mxu0 0.0
        %633 = vmatprep.subr.mxu0 0.0
        %634 = vmatpush1.msra.mxu0 0.0
        %635 = vmatprep.subr.mxu0 0.0
        %636 = vmatpush1.msra.mxu0 0.0
        %637 = vmatprep.subr.mxu0 0.0
        %638 = vmatpush1.msra.mxu0 0.0
        %639 = vmatprep.subr.mxu0 0.0
        %640 = vmatpush1.msra.mxu0 0.0
        %641 = vmatprep.subr.mxu0 0.0
        %642 = vmatpush1.msra.mxu0 0.0
        %643 = vmatprep.mubr.f32.mxu0 0.0
        %644 = vmatmul.mubr.f32.gmra.mrb[0].mxu0 %v577
        %v645 = vpop.f32.mrb[0].mxu0
        %v646 = vadd.f32 %v573, %v645
        %v647 = vpop.f32.mrb[0].mxu0
        %648 = vdwg.mxu0
        %v649 = vmax.f32 %v646, 0.0
        %v650 = vld [vmem:[%s461] sm:$0xff]
        %v651 = vld [vmem:[%s461 + $0x8] sm:$0xff]
        %652 = vrot.lane.b32.xlu0 %v495, 80
        %v653 = vpop.permute.xlu0 %652
        %vm655 = vcmask 130048
        %v657 = vsel %vm655, %v649, 0
        %659 = vmatprep.subr.mxu0 0.0
        %660 = vmatpush1.msra.mxu0 %v650
        %661 = vmatprep.subr.mxu0 0.0
        %662 = vmatpush1.msra.mxu0 %v651
        %663 = vmatprep.subr.mxu0 0.0
        %664 = vmatpush1.msra.mxu0 0.0
        %665 = vmatprep.subr.mxu0 0.0
        %666 = vmatpush1.msra.mxu0 0.0
        %667 = vmatprep.subr.mxu0 0.0
        %668 = vmatpush1.msra.mxu0 0.0
        %669 = vmatprep.subr.mxu0 0.0
        %670 = vmatpush1.msra.mxu0 0.0
        %671 = vmatprep.subr.mxu0 0.0
        %672 = vmatpush1.msra.mxu0 0.0
        %673 = vmatprep.subr.mxu0 0.0
        %674 = vmatpush1.msra.mxu0 0.0
        %675 = vmatprep.subr.mxu0 0.0
        %676 = vmatpush1.msra.mxu0 0.0
        %677 = vmatprep.subr.mxu0 0.0
        %678 = vmatpush1.msra.mxu0 0.0
        %679 = vmatprep.subr.mxu0 0.0
        %680 = vmatpush1.msra.mxu0 0.0
        %681 = vmatprep.subr.mxu0 0.0
        %682 = vmatpush1.msra.mxu0 0.0
        %683 = vmatprep.subr.mxu0 0.0
        %684 = vmatpush1.msra.mxu0 0.0
        %685 = vmatprep.subr.mxu0 0.0
        %686 = vmatpush1.msra.mxu0 0.0
        %687 = vmatprep.subr.mxu0 0.0
        %688 = vmatpush1.msra.mxu0 0.0
        %689 = vmatprep.subr.mxu0 0.0
        %690 = vmatpush1.msra.mxu0 0.0
        %691 = vmatprep.subr.mxu0 0.0
        %692 = vmatpush1.msra.mxu0 0.0
        %693 = vmatprep.subr.mxu0 0.0
        %694 = vmatpush1.msra.mxu0 0.0
        %695 = vmatprep.subr.mxu0 0.0
        %696 = vmatpush1.msra.mxu0 0.0
        %697 = vmatprep.subr.mxu0 0.0
        %698 = vmatpush1.msra.mxu0 0.0
        %699 = vmatprep.subr.mxu0 0.0
        %700 = vmatpush1.msra.mxu0 0.0
        %701 = vmatprep.subr.mxu0 0.0
        %702 = vmatpush1.msra.mxu0 0.0
        %703 = vmatprep.subr.mxu0 0.0
        %704 = vmatpush1.msra.mxu0 0.0
        %705 = vmatprep.subr.mxu0 0.0
        %706 = vmatpush1.msra.mxu0 0.0
        %707 = vmatprep.subr.mxu0 0.0
        %708 = vmatpush1.msra.mxu0 0.0
        %709 = vmatprep.subr.mxu0 0.0
        %710 = vmatpush1.msra.mxu0 0.0
        %711 = vmatprep.subr.mxu0 0.0
        %712 = vmatpush1.msra.mxu0 0.0
        %713 = vmatprep.subr.mxu0 0.0
        %714 = vmatpush1.msra.mxu0 0.0
        %715 = vmatprep.subr.mxu0 0.0
        %716 = vmatpush1.msra.mxu0 0.0
        %717 = vmatprep.subr.mxu0 0.0
        %718 = vmatpush1.msra.mxu0 0.0
        %719 = vmatprep.subr.mxu0 0.0
        %720 = vmatpush1.msra.mxu0 0.0
        %721 = vmatprep.subr.mxu0 0.0
        %722 = vmatpush1.msra.mxu0 0.0
        %723 = vmatprep.mubr.f32.mxu0 0.0
        %724 = vmatmul.mubr.f32.gmra.mrb[0].mxu0 %v657
        %v725 = vpop.f32.mrb[0].mxu0
        %v726 = vadd.f32 %v653, %v725
        %v727 = vpop.f32.mrb[0].mxu0
        %728 = vdwg.mxu0
        %v729 = vadd.f32 %v726, 1.0
        %v730 = vmul.f32 %v726, %v726
        %732 = vrot.lane.b32.xlu0 %v730, 8
        %v733 = vpop.permute.xlu0 %732
        %v735 = vsub.f32 %v729, %v733
        %v736 = vmul.f32 %v726, 1.442695
        %v737 = vpow.pop %v736
        %v738 = vsub.f32 %v735, %v737
        %740 = vrot.lane.b32.xlu0 %v738, 120
        %v741 = vpop.permute.xlu0 %740
        %vm743 = vcmask 64512
        %v744 = vsel %vm743, %v741, 0.0
        %745 = vadd.xlane.f32.xlu0 %v744
        %v746 = vpop.xlane.xlu0 %745
        %v747 = vmul.f32 %v746, -0.5
        %v748 = vld [vmem:[%s472] sm:$0xff]
        %v749 = vmul.f32 %v726, 0.5
        %v750 = vmul.f32 %v749, 1.442695
        %v751 = vpow.pop %v750
        %753 = vrot.lane.b32.xlu0 %v751, 120
        %v754 = vpop.permute.xlu0 %753
        %v756 = vmul.f32 %v748, %v754
        %v757 = vadd.f32 %v726, %v756
        %v758 = vsel %vm743, %v757, -inf
        %759 = vmax.xlane.f32.xlu0 %v758
        %v760 = vpop.xlane.xlu0 %759
        %v761 = vsub.f32 %v757, %v760
        %v762 = vmul.f32 %v761, 1.442695
        %v763 = vpow.pop %v762
        %v764 = vsel %vm743, %v763, 0.0
        %765 = vadd.xlane.f32.xlu0 %v764
        %v766 = vpop.xlane.xlu0 %765
        %v767 = vrcp.pop %v766
        %v768 = vmul.f32 %v763, %v767
        %p769 = scmp.eq.s32.totalorder %s23, 0
        %s770 = scalar_select %p769, 32, 48
        %v771 = vld [vmem:[%s465] sm:$0xff]
        %v772 = vld [vmem:[%s451] sm:$0xff]
        %v773 = vld [vmem:[%s451 + $0x8] sm:$0xff]
        %v775 = vsel %vm655, %v771, 0
        %777 = vmatprep.subr.mxu0 0.0
        %778 = vmatpush1.msra.mxu0 %v772
        %779 = vmatprep.subr.mxu0 0.0
        %780 = vmatpush1.msra.mxu0 %v773
        %781 = vmatprep.subr.mxu0 0.0
        %782 = vmatpush1.msra.mxu0 0.0
        %783 = vmatprep.subr.mxu0 0.0
        %784 = vmatpush1.msra.mxu0 0.0
        %785 = vmatprep.subr.mxu0 0.0
        %786 = vmatpush1.msra.mxu0 0.0
        %787 = vmatprep.subr.mxu0 0.0
        %788 = vmatpush1.msra.mxu0 0.0
        %789 = vmatprep.subr.mxu0 0.0
        %790 = vmatpush1.msra.mxu0 0.0
        %791 = vmatprep.subr.mxu0 0.0
        %792 = vmatpush1.msra.mxu0 0.0
        %793 = vmatprep.subr.mxu0 0.0
        %794 = vmatpush1.msra.mxu0 0.0
        %795 = vmatprep.subr.mxu0 0.0
        %796 = vmatpush1.msra.mxu0 0.0
        %797 = vmatprep.subr.mxu0 0.0
        %798 = vmatpush1.msra.mxu0 0.0
        %799 = vmatprep.subr.mxu0 0.0
        %800 = vmatpush1.msra.mxu0 0.0
        %801 = vmatprep.subr.mxu0 0.0
        %802 = vmatpush1.msra.mxu0 0.0
        %803 = vmatprep.subr.mxu0 0.0
        %804 = vmatpush1.msra.mxu0 0.0
        %805 = vmatprep.subr.mxu0 0.0
        %806 = vmatpush1.msra.mxu0 0.0
        %807 = vmatprep.subr.mxu0 0.0
        %808 = vmatpush1.msra.mxu0 0.0
        %809 = vmatprep.subr.mxu0 0.0
        %810 = vmatpush1.msra.mxu0 0.0
        %811 = vmatprep.subr.mxu0 0.0
        %812 = vmatpush1.msra.mxu0 0.0
        %813 = vmatprep.subr.mxu0 0.0
        %814 = vmatpush1.msra.mxu0 0.0
        %815 = vmatprep.subr.mxu0 0.0
        %816 = vmatpush1.msra.mxu0 0.0
        %817 = vmatprep.subr.mxu0 0.0
        %818 = vmatpush1.msra.mxu0 0.0
        %819 = vmatprep.subr.mxu0 0.0
        %820 = vmatpush1.msra.mxu0 0.0
        %821 = vmatprep.subr.mxu0 0.0
        %822 = vmatpush1.msra.mxu0 0.0
        %823 = vmatprep.subr.mxu0 0.0
        %824 = vmatpush1.msra.mxu0 0.0
        %825 = vmatprep.subr.mxu0 0.0
        %826 = vmatpush1.msra.mxu0 0.0
        %827 = vmatprep.subr.mxu0 0.0
        %828 = vmatpush1.msra.mxu0 0.0
        %829 = vmatprep.subr.mxu0 0.0
        %830 = vmatpush1.msra.mxu0 0.0
        %831 = vmatprep.subr.mxu0 0.0
        %832 = vmatpush1.msra.mxu0 0.0
        %833 = vmatprep.subr.mxu0 0.0
        %834 = vmatpush1.msra.mxu0 0.0
        %835 = vmatprep.subr.mxu0 0.0
        %836 = vmatpush1.msra.mxu0 0.0
        %837 = vmatprep.subr.mxu0 0.0
        %838 = vmatpush1.msra.mxu0 0.0
        %839 = vmatprep.subr.mxu0 0.0
        %840 = vmatpush1.msra.mxu0 0.0
        %841 = vmatprep.mubr.f32.mxu0 0.0
        %842 = vmatmul.mubr.f32.gmra.mrb[0].mxu0 %v775
        %v843 = vpop.f32.mrb[0].mxu0
        %v844 = vadd.f32 0.0, %v843
        %v845 = vpop.f32.mrb[0].mxu0
        %846 = vdwg.mxu0
        %v847 = vlaneseq
        %v848 = vand.u32 %v847, 127
        %v849 = vstv %s770
        %vm850 = vcmp.lt.s32.totalorder %v848, %v849
        %v851 = vsel %vm850, %v844, -1e+30
        %852 = vmax.xlane.f32.xlu0 %v851
        %v853 = vpop.xlane.xlu0 %852
        %v854 = vsub.f32 %v851, %v853
        %v855 = vmul.f32 %v854, 1.442695
        %v856 = vpow.pop %v855
        %857 = vadd.xlane.f32.xlu0 %v856
        %v858 = vpop.xlane.xlu0 %857
        %v859 = vrcp.pop %v858
        %v860 = vmul.f32 %v856, %v859
        %v862 = vsel %vm743, %v768, 0
        %864 = vmatprep.subr.mxu0 0.0
        %865 = vmatpush1.msra.mxu0 %v860
        %866 = vmatprep.subr.mxu0 0.0
        %867 = vmatpush1.msra.mxu0 0.0
        %868 = vmatprep.subr.mxu0 0.0
        %869 = vmatpush1.msra.mxu0 0.0
        %870 = vmatprep.subr.mxu0 0.0
        %871 = vmatpush1.msra.mxu0 0.0
        %872 = vmatprep.subr.mxu0 0.0
        %873 = vmatpush1.msra.mxu0 0.0
        %874 = vmatprep.subr.mxu0 0.0
        %875 = vmatpush1.msra.mxu0 0.0
        %876 = vmatprep.subr.mxu0 0.0
        %877 = vmatpush1.msra.mxu0 0.0
        %878 = vmatprep.subr.mxu0 0.0
        %879 = vmatpush1.msra.mxu0 0.0
        %880 = vmatprep.subr.mxu0 0.0
        %881 = vmatpush1.msra.mxu0 0.0
        %882 = vmatprep.subr.mxu0 0.0
        %883 = vmatpush1.msra.mxu0 0.0
        %884 = vmatprep.subr.mxu0 0.0
        %885 = vmatpush1.msra.mxu0 0.0
        %886 = vmatprep.subr.mxu0 0.0
        %887 = vmatpush1.msra.mxu0 0.0
        %888 = vmatprep.subr.mxu0 0.0
        %889 = vmatpush1.msra.mxu0 0.0
        %890 = vmatprep.subr.mxu0 0.0
        %891 = vmatpush1.msra.mxu0 0.0
        %892 = vmatprep.subr.mxu0 0.0
        %893 = vmatpush1.msra.mxu0 0.0
        %894 = vmatprep.subr.mxu0 0.0
        %895 = vmatpush1.msra.mxu0 0.0
        %896 = vmatprep.subr.mxu0 0.0
        %897 = vmatpush1.msra.mxu0 0.0
        %898 = vmatprep.subr.mxu0 0.0
        %899 = vmatpush1.msra.mxu0 0.0
        %900 = vmatprep.subr.mxu0 0.0
        %901 = vmatpush1.msra.mxu0 0.0
        %902 = vmatprep.subr.mxu0 0.0
        %903 = vmatpush1.msra.mxu0 0.0
        %904 = vmatprep.subr.mxu0 0.0
        %905 = vmatpush1.msra.mxu0 0.0
        %906 = vmatprep.subr.mxu0 0.0
        %907 = vmatpush1.msra.mxu0 0.0
        %908 = vmatprep.subr.mxu0 0.0
        %909 = vmatpush1.msra.mxu0 0.0
        %910 = vmatprep.subr.mxu0 0.0
        %911 = vmatpush1.msra.mxu0 0.0
        %912 = vmatprep.subr.mxu0 0.0
        %913 = vmatpush1.msra.mxu0 0.0
        %914 = vmatprep.subr.mxu0 0.0
        %915 = vmatpush1.msra.mxu0 0.0
        %916 = vmatprep.subr.mxu0 0.0
        %917 = vmatpush1.msra.mxu0 0.0
        %918 = vmatprep.subr.mxu0 0.0
        %919 = vmatpush1.msra.mxu0 0.0
        %920 = vmatprep.subr.mxu0 0.0
        %921 = vmatpush1.msra.mxu0 0.0
        %922 = vmatprep.subr.mxu0 0.0
        %923 = vmatpush1.msra.mxu0 0.0
        %924 = vmatprep.subr.mxu0 0.0
        %925 = vmatpush1.msra.mxu0 0.0
        %926 = vmatprep.subr.mxu0 0.0
        %927 = vmatpush1.msra.mxu0 0.0
        %928 = vmatprep.mubr.f32.mxu0 0.0
        %929 = vmatmul.mubr.f32.gmra.mrb[0].mxu0 %v862
        %v930 = vpop.f32.mrb[0].mxu0
        %v931 = vadd.f32 1e-06, %v930
        %v932 = vpop.f32.mrb[0].mxu0
        %933 = vdwg.mxu0
        %v934 = vlog2.pop %v931
        %v935 = vmul.f32 %v934, 0.6931472
        %v936 = vld [vmem:[%s437] sm:$0xff]
        %v937 = vmul.f32 %v935, %v936
        %938 = vadd.xlane.f32.xlu0 %v937
        %v939 = vpop.xlane.xlu0 %938
        %v940 = vsub.f32 0.0, %v939
        %v941 = vrot.slane %v940, 4
        %v942 = vadd.f32 %v940, %v941
        %v943 = vrot.slane %v942, 2
        %v944 = vadd.f32 %v942, %v943
        %v945 = vrot.slane %v944, 1
        %v946 = vadd.f32 %v944, %v945
        %v947 = vmul.f32 %v946, 0.125
        %v948 = vrot.slane %v747, 4
        %v949 = vadd.f32 %v747, %v948
        %v950 = vrot.slane %v949, 2
        %v951 = vadd.f32 %v949, %v950
        %v952 = vrot.slane %v951, 1
        %v953 = vadd.f32 %v951, %v952
        %v954 = vmul.f32 %v953, 0.125
        %v955 = vlaneseq
        %v956 = vshrl.u32 %v955, 7
        %vm957 = vcmp.eq.s32.totalorder %v956, 0
        %vm958 = vcmp.eq.s32.totalorder %v848, 0
        %vm959 = vmand %vm957, %vm958
        %v960 = vsel %vm959, %v947, 0.0
        %vm961 = vcmp.eq.s32.totalorder %v848, 1
        %vm962 = vmand %vm957, %vm961
        %v963 = vsel %vm962, %v954, 0.0
        %v964 = vadd.f32 %v960, %v963
        %965 = vst [vmem:[%s433] sm:$0xff] %v964
        %s966 = sand.u32 %s265, 1
        %s967 = scalar_lea.sflag [#allocation3], %s966
        %s968 = sand.u32 %s265, 1
        %s969 = smul.addr %s968, 8
        %s970 = scalar_lea.vmem [#allocation2], %s969
        // Predicated region
        $region57: #{tpu_custom_call.1} parent=55 // pred_check
          %p971 = pneg %p275
        $region58: #{tpu_custom_call.1} parent=55 // pred_check_branch
          %973 = sbr.rel (%p971) target = $region60
        $region59: #{tpu_custom_call.1} parent=55 // pred_region
          %s975 = ssub.s32 128, 128
          %976 = vsyncadd %s967, %s975
          %s977 = smul.addr %s23, 128
          %s978 = scalar_lea.hbm %s9, %s977
          %s980 = sshll.u32 %s970, 4
          %s981 = int_to_ptr.vmem [resolvable:$true] %s980
          %983 = dma.vmem_to_hbm [thread:$0]  %s981, 128, %s978, %s967
        $region60: #{tpu_custom_call.1} parent=55 // pred_fallthru
          _
      $region56: #{tpu_custom_call.1} parent=5 // pred_fallthru
        _
      %p984 = scmp.le.s32.totalorder 2, %s18
      // Predicated region
      $region61: #{tpu_custom_call.1} parent=5 // pred_check
        %p985 = pneg %p984
      $region62: #{tpu_custom_call.1} parent=5 // pred_check_branch
        %987 = sbr.rel (%p985) target = $region64
      $region63: #{tpu_custom_call.1} parent=5 // pred_region
        %s988 = ssub.s32 %s18, 2
        // Predicated region
        $region65: #{tpu_custom_call.1} parent=63 // pred_check
          %p989 = pneg %p281
        $region66: #{tpu_custom_call.1} parent=63 // pred_check_branch
          %991 = sbr.rel (%p989) target = $region68
        $region67: #{tpu_custom_call.1} parent=63 // pred_region
          %s992 = sand.u32 %s266, 1
          %s993 = scalar_lea.sflag [#allocation3], %s992
          %s994 = sand.u32 %s266, 1
          %s995 = smul.addr %s994, 8
          %s996 = scalar_lea.vmem [#allocation2], %s995
          %997 = dma.done %s993, 128
        $region68: #{tpu_custom_call.1} parent=63 // pred_fallthru
          _
      $region64: #{tpu_custom_call.1} parent=5 // pred_fallthru
        _
    $region6: #{tpu_custom_call.1} parent=1 // loop_footer
      %s22 = sadd.s32 1, %s18
    $region7: #{tpu_custom_call.1} parent=1 // loop_footer_branch
      %17 = sbr.rel target = $region3
    $region8: #{tpu_custom_call.1} parent=1 // loop_exit
      _
    %998 = vsyncpa [#allocation3], 1
    %s999 = scalar_lea.sflag [#allocation3], 1
    %1000 = vsyncpa %s999, 1

</llo_original>
